<compile_context>
chip_gen: v5e
topology: v5e:2x2
jax: 0.10.0
libtpu: 0.0.40
codegen_flags: <defaults>
</compile_context>

<pallas_src>
import jax
import jax.numpy as jnp
from jax.experimental import pallas as pl
from jax.experimental.pallas import tpu as pltpu

INPUT_SIZE = 32
OUTPUT_SIZE = 8
HIDDEN_SIZE = 128
NUM_HIDDEN_LAYER = 2

MAX_TILE_B = 1024  # rows per grid step (multiple of 128); sweepable 512-2048


def _grid_for_batch(B):
    """Pick (padded batch, batch tile). Tile is a multiple of 128 so the transposed
    output block is fully lane-dense; keep >=2 grid steps when possible (v7x 2 TCs)."""
    Bp = ((max(B, 1) + 127) // 128) * 128
    if Bp <= 128:
        return 128, 128                      # single step: all cost is fixed overhead anyway
    tile = min(MAX_TILE_B, (Bp // 2 // 128) * 128)
    tile = max(tile, 128)
    Bp = ((Bp + tile - 1) // tile) * tile    # re-pad so the grid tiles evenly
    return Bp, tile


def actor_kernel(x_ref, w_in_ref, b_in_ref, w_h_ref, b_h_ref,
                 w_out_ref, b_out_ref, out_ref):
    # Cast x to bf16 in-kernel (VPU, hidden under the MXU); f32 accumulation everywhere.
    x = x_ref[...].astype(jnp.bfloat16)

    # input layer + fused ReLU/downcast
    h = jnp.dot(x, w_in_ref[...], preferred_element_type=jnp.float32) + b_in_ref[...]
    h = jnp.maximum(h, 0.0).astype(jnp.bfloat16)

    # shared hidden layer applied NUM_HIDDEN_LAYER times (same weights, as in PyTorch)
    for _ in range(NUM_HIDDEN_LAYER):
        h = jnp.dot(h, w_h_ref[...], preferred_element_type=jnp.float32) + b_h_ref[...]
        h = jnp.maximum(h, 0.0).astype(jnp.bfloat16)

    # Output layer computed transposed: (OUT, TILE_B), batch on the lane axis.
    # w_out is [out, in]; contraction on the hidden dim of both operands (trans-B MXU mode).
    logits_t = jnp.einsum('oh,bh->ob', w_out_ref[...], h,
                          preferred_element_type=jnp.float32) + b_out_ref[...]

    # Categorical(logits).probs == softmax(logits); reduce over the (8-row) sublane axis.
    m = jnp.max(logits_t, axis=0, keepdims=True)
    e = jnp.exp(logits_t - m)
    probs_t = e / jnp.sum(e, axis=0, keepdims=True)   # exact divide: probs sum to 1 tightly

    # Lane-dense stores: full 128+ lane rows, no masked vst.
    out_ref[:OUTPUT_SIZE, :] = logits_t
    out_ref[OUTPUT_SIZE:, :] = probs_t


def actor_forward(x, w_in, b_in, w_h, b_h, w_out, b_out):
    """x: [B, INPUT_SIZE] f32; prepared params from prepare_params().
    Returns (logits, probs), each [B, OUTPUT_SIZE] f32."""
    B = x.shape[0]
    Bp, tile_b = _grid_for_batch(B)
    if Bp != B:
        x = jnp.pad(x, ((0, Bp - B), (0, 0)))   # single f32 pad; no wrapper-side cast

    const = lambda i: (0, 0)  # weights/biases: same block every step -> VMEM-resident

    out_t = pl.pallas_call(
        actor_kernel,
        out_shape=jax.ShapeDtypeStruct((2 * OUTPUT_SIZE, Bp), jnp.float32),
        grid=(Bp // tile_b,),
        in_specs=[
            pl.BlockSpec((tile_b, INPUT_SIZE), lambda i: (i, 0)),       # x tile advances
            pl.BlockSpec((INPUT_SIZE, HIDDEN_SIZE), const),             # w_in  [in, out] bf16
            pl.BlockSpec((1, HIDDEN_SIZE), const),                      # b_in  f32
            pl.BlockSpec((HIDDEN_SIZE, HIDDEN_SIZE), const),            # w_h   [in, out] bf16
            pl.BlockSpec((1, HIDDEN_SIZE), const),                      # b_h   f32
            pl.BlockSpec((OUTPUT_SIZE, HIDDEN_SIZE), const),            # w_out [out, in] bf16
            pl.BlockSpec((OUTPUT_SIZE, 1), const),                      # b_out f32 column
        ],
        out_specs=pl.BlockSpec((2 * OUTPUT_SIZE, tile_b), lambda i: (0, i)),
        compiler_params=pltpu.CompilerParams(
            dimension_semantics=("parallel",)),  # batch tiles shard across v7x's 2 TCs
    )(x, w_in, b_in, w_h, b_h, w_out, b_out)

    logits = out_t[:OUTPUT_SIZE, :B].T
    probs = out_t[OUTPUT_SIZE:, :B].T
    return logits, probs


def init_params(key):
    """PyTorch nn.Linear default init / layout: weight [out, in], bias [out],
    U(-1/sqrt(fan_in), 1/sqrt(fan_in)), all f32."""
    k = jax.random.split(key, 6)

    def uniform(rng, shape, fan_in):
        bound = 1.0 / jnp.sqrt(jnp.float32(fan_in))
        return jax.random.uniform(rng, shape, jnp.float32, -bound, bound)

    w_in = uniform(k[0], (HIDDEN_SIZE, INPUT_SIZE), INPUT_SIZE)
    b_in = uniform(k[1], (HIDDEN_SIZE,), INPUT_SIZE)
    w_h = uniform(k[2], (HIDDEN_SIZE, HIDDEN_SIZE), HIDDEN_SIZE)
    b_h = uniform(k[3], (HIDDEN_SIZE,), HIDDEN_SIZE)
    w_out = uniform(k[4], (OUTPUT_SIZE, HIDDEN_SIZE), HIDDEN_SIZE)
    b_out = uniform(k[5], (OUTPUT_SIZE,), HIDDEN_SIZE)
    return w_in, b_in, w_h, b_h, w_out, b_out


def prepare_params(w_in, b_in, w_h, b_h, w_out, b_out):
    """One-time layout/dtype prep, hoisted out of the per-call path."""
    return (w_in.T.astype(jnp.bfloat16),                       # [in, out]
            b_in.reshape(1, HIDDEN_SIZE).astype(jnp.float32),
            w_h.T.astype(jnp.bfloat16),                        # [in, out]
            b_h.reshape(1, HIDDEN_SIZE).astype(jnp.float32),
            w_out.astype(jnp.bfloat16),                        # [out, in] (trans-B matmul)
            b_out.reshape(OUTPUT_SIZE, 1).astype(jnp.float32))


def reference_forward_f32(x, w_in, b_in, w_h, b_h, w_out, b_out):
    """Pure-f32 reference in the original PyTorch layout."""
    h = jnp.maximum(x @ w_in.T + b_in, 0.0)
    for _ in range(NUM_HIDDEN_LAYER):
        h = jnp.maximum(h @ w_h.T + b_h, 0.0)
    logits = h @ w_out.T + b_out
    return logits, jax.nn.softmax(logits, axis=-1)


def reference_forward_bf16(x, w_in, b_in, w_h, b_h, w_out, b_out):
    """Reference with the same bf16-operand / f32-accumulate casting as the kernel
    (consumes the *prepared* params)."""
    h = jnp.dot(x.astype(jnp.bfloat16), w_in, preferred_element_type=jnp.float32) + b_in
    h = jnp.maximum(h, 0.0).astype(jnp.bfloat16)
    for _ in range(NUM_HIDDEN_LAYER):
        h = jnp.dot(h, w_h, preferred_element_type=jnp.float32) + b_h
        h = jnp.maximum(h, 0.0).astype(jnp.bfloat16)
    logits = jnp.einsum('bh,oh->bo', h, w_out,
                        preferred_element_type=jnp.float32) + b_out.reshape(1, -1)
    return logits, jax.nn.softmax(logits, axis=-1)


if __name__ == "__main__":
    key = jax.random.PRNGKey(0)
    kx, kp = jax.random.split(key)

    raw_params = init_params(kp)                 # f32, PyTorch layout (the "nn.Module" weights)
    prepared = prepare_params(*raw_params)       # bf16 weights / broadcast biases, done once
    forward = jax.jit(actor_forward)

    # Two cases: even 2-step grid (256 -> 2x128, both v7x TCs) and a ragged single tile.
    for BATCH in (256, 77):
        x = jax.random.normal(jax.random.fold_in(kx, BATCH), (BATCH, INPUT_SIZE), jnp.float32)

        logit, prob = forward(x, *prepared)
        jax.block_until_ready((logit, prob))

        # Tight check against a reference with matching bf16-matmul casting.
        ref_logit, ref_prob = reference_forward_bf16(x, *prepared)
        assert jnp.allclose(logit, ref_logit, atol=2e-3, rtol=2e-3)
        assert jnp.allclose(prob, ref_prob, atol=2e-3, rtol=2e-3)

        # Loose sanity check against the pure-f32 PyTorch-style reference.
        f32_logit, f32_prob = reference_forward_f32(x, *raw_params)
        assert jnp.allclose(logit, f32_logit, atol=5e-2, rtol=5e-2)
        assert jnp.allclose(prob, f32_prob, atol=2e-2, rtol=2e-2)

        # Exact division in the kernel -> probs normalize tightly.
        assert jnp.allclose(jnp.sum(prob, axis=-1), 1.0, atol=1e-5)

    # TODO(synk): torch.distributions.Categorical object itself has no Pallas equivalent;
    # we return its defining tensors (logits, probs) instead.
    print("KERNEL_OK")
</pallas_src>

<mosaic_0001>
module attributes {stable_mosaic.version = 11 : i64} {
  func.func @actor_kernel(%arg0: i32, %arg1: memref<128x32xf32, #tpu.memory_space<vmem>>, %arg2: memref<32x128xbf16, #tpu.memory_space<vmem>>, %arg3: memref<1x128xf32, #tpu.memory_space<vmem>>, %arg4: memref<128x128xbf16, #tpu.memory_space<vmem>>, %arg5: memref<1x128xf32, #tpu.memory_space<vmem>>, %arg6: memref<8x128xbf16, #tpu.memory_space<vmem>>, %arg7: memref<8x1xf32, #tpu.memory_space<vmem>>, %arg8: memref<16x128xf32, #tpu.memory_space<vmem>>) attributes {dimension_semantics = [#tpu.dimension_semantics<parallel>], iteration_bounds = array<i64: 2>, scalar_prefetch = 0 : i64, scratch_operands = 0 : i64, tpu.core_type = #tpu.core_type<tc>, window_params = [{transform_indices = @transform_0, window_bounds = array<i64: 128, 32>}, {pipeline_mode = #tpu.pipeline_mode<synchronous>, transform_indices = @transform_1, window_bounds = array<i64: 32, 128>}, {pipeline_mode = #tpu.pipeline_mode<synchronous>, transform_indices = @transform_2, window_bounds = array<i64: 1, 128>}, {pipeline_mode = #tpu.pipeline_mode<synchronous>, transform_indices = @transform_3, window_bounds = array<i64: 128, 128>}, {pipeline_mode = #tpu.pipeline_mode<synchronous>, transform_indices = @transform_4, window_bounds = array<i64: 1, 128>}, {pipeline_mode = #tpu.pipeline_mode<synchronous>, transform_indices = @transform_5, window_bounds = array<i64: 8, 128>}, {pipeline_mode = #tpu.pipeline_mode<synchronous>, transform_indices = @transform_6, window_bounds = array<i64: 8, 1>}, {transform_indices = @transform_7, window_bounds = array<i64: 16, 128>}]} {
    %c0 = arith.constant 0 : index
    %c0_0 = arith.constant 0 : index
    %0 = vector.load %arg1[%c0, %c0_0] : memref<128x32xf32, #tpu.memory_space<vmem>>, vector<128x32xf32>
    %1 = arith.truncf %0 : vector<128x32xf32> to vector<128x32xbf16>
    %c0_1 = arith.constant 0 : index
    %c0_2 = arith.constant 0 : index
    %2 = vector.load %arg2[%c0_1, %c0_2] : memref<32x128xbf16, #tpu.memory_space<vmem>>, vector<32x128xbf16>
    %cst = arith.constant dense<0.000000e+00> : vector<128x128xf32>
    %3 = tpu.matmul %1, %2, %cst {dimension_numbers = #tpu.dot_dimension_numbers<[1], [0], [0], [1], [0, 0, 1, 1], [], []>} : vector<128x32xbf16>, vector<32x128xbf16>, vector<128x128xf32> -> vector<128x128xf32>
    %c0_3 = arith.constant 0 : index
    %c0_4 = arith.constant 0 : index
    %4 = vector.load %arg3[%c0_3, %c0_4] : memref<1x128xf32, #tpu.memory_space<vmem>>, vector<1x128xf32>
    %5 = vector.broadcast %4 : vector<1x128xf32> to vector<128x128xf32>
    %6 = arith.addf %3, %5 : vector<128x128xf32>
    %cst_5 = arith.constant 0.000000e+00 : f32
    %7 = vector.broadcast %cst_5 : f32 to vector<128x128xf32>
    %8 = arith.maximumf %6, %7 : vector<128x128xf32>
    %9 = arith.truncf %8 : vector<128x128xf32> to vector<128x128xbf16>
    %c0_6 = arith.constant 0 : index
    %c0_7 = arith.constant 0 : index
    %10 = vector.load %arg4[%c0_6, %c0_7] : memref<128x128xbf16, #tpu.memory_space<vmem>>, vector<128x128xbf16>
    %cst_8 = arith.constant dense<0.000000e+00> : vector<128x128xf32>
    %11 = tpu.matmul %9, %10, %cst_8 {dimension_numbers = #tpu.dot_dimension_numbers<[1], [0], [0], [1], [0, 0, 1, 1], [], []>} : vector<128x128xbf16>, vector<128x128xbf16>, vector<128x128xf32> -> vector<128x128xf32>
    %c0_9 = arith.constant 0 : index
    %c0_10 = arith.constant 0 : index
    %12 = vector.load %arg5[%c0_9, %c0_10] : memref<1x128xf32, #tpu.memory_space<vmem>>, vector<1x128xf32>
    %13 = vector.broadcast %12 : vector<1x128xf32> to vector<128x128xf32>
    %14 = arith.addf %11, %13 : vector<128x128xf32>
    %cst_11 = arith.constant 0.000000e+00 : f32
    %15 = vector.broadcast %cst_11 : f32 to vector<128x128xf32>
    %16 = arith.maximumf %14, %15 : vector<128x128xf32>
    %17 = arith.truncf %16 : vector<128x128xf32> to vector<128x128xbf16>
    %c0_12 = arith.constant 0 : index
    %c0_13 = arith.constant 0 : index
    %18 = vector.load %arg4[%c0_12, %c0_13] : memref<128x128xbf16, #tpu.memory_space<vmem>>, vector<128x128xbf16>
    %cst_14 = arith.constant dense<0.000000e+00> : vector<128x128xf32>
    %19 = tpu.matmul %17, %18, %cst_14 {dimension_numbers = #tpu.dot_dimension_numbers<[1], [0], [0], [1], [0, 0, 1, 1], [], []>} : vector<128x128xbf16>, vector<128x128xbf16>, vector<128x128xf32> -> vector<128x128xf32>
    %c0_15 = arith.constant 0 : index
    %c0_16 = arith.constant 0 : index
    %20 = vector.load %arg5[%c0_15, %c0_16] : memref<1x128xf32, #tpu.memory_space<vmem>>, vector<1x128xf32>
    %21 = vector.broadcast %20 : vector<1x128xf32> to vector<128x128xf32>
    %22 = arith.addf %19, %21 : vector<128x128xf32>
    %cst_17 = arith.constant 0.000000e+00 : f32
    %23 = vector.broadcast %cst_17 : f32 to vector<128x128xf32>
    %24 = arith.maximumf %22, %23 : vector<128x128xf32>
    %25 = arith.truncf %24 : vector<128x128xf32> to vector<128x128xbf16>
    %c0_18 = arith.constant 0 : index
    %c0_19 = arith.constant 0 : index
    %26 = vector.load %arg6[%c0_18, %c0_19] : memref<8x128xbf16, #tpu.memory_space<vmem>>, vector<8x128xbf16>
    "tpu.trace_start"() <{level = 10 : i32, message = "oh,bh->ob"}> : () -> ()
    %cst_20 = arith.constant dense<0.000000e+00> : vector<8x128xf32>
    %27 = tpu.matmul %26, %25, %cst_20 {dimension_numbers = #tpu.dot_dimension_numbers<[1], [1], [0], [0], [0, 0, 1, 0], [], []>} : vector<8x128xbf16>, vector<128x128xbf16>, vector<8x128xf32> -> vector<8x128xf32>
    "tpu.trace_stop"() : () -> ()
    %c0_21 = arith.constant 0 : index
    %c0_22 = arith.constant 0 : index
    %28 = vector.load %arg7[%c0_21, %c0_22] : memref<8x1xf32, #tpu.memory_space<vmem>>, vector<8x1xf32>
    %29 = vector.broadcast %28 : vector<8x1xf32> to vector<8x128xf32>
    %30 = arith.addf %27, %29 : vector<8x128xf32>
    %cst_23 = arith.constant dense<0xFF800000> : vector<128xf32>
    %31 = vector.multi_reduction <maximumf>, %30, %cst_23 [0] : vector<8x128xf32> to vector<128xf32>
    %32 = vector.shape_cast %31 : vector<128xf32> to vector<1x128xf32>
    %33 = vector.broadcast %32 : vector<1x128xf32> to vector<8x128xf32>
    %34 = arith.subf %30, %33 : vector<8x128xf32>
    %35 = math.exp %34 : vector<8x128xf32>
    %cst_24 = arith.constant dense<0.000000e+00> : vector<128xf32>
    %36 = vector.multi_reduction <add>, %35, %cst_24 [0] : vector<8x128xf32> to vector<128xf32>
    %37 = vector.shape_cast %36 : vector<128xf32> to vector<1x128xf32>
    %38 = vector.broadcast %37 : vector<1x128xf32> to vector<8x128xf32>
    %39 = arith.divf %35, %38 : vector<8x128xf32>
    %c0_25 = arith.constant 0 : index
    %c0_26 = arith.constant 0 : index
    %40 = vector.load %arg8[%c0_25, %c0_26] : memref<16x128xf32, #tpu.memory_space<vmem>>, vector<8x128xf32>
    tpu.vector_store %arg8[%c0_25, %c0_26], %30 {strides = array<i32>} : memref<16x128xf32, #tpu.memory_space<vmem>>, vector<8x128xf32>,
    %c8 = arith.constant 8 : index
    %c0_27 = arith.constant 0 : index
    %41 = vector.load %arg8[%c8, %c0_27] : memref<16x128xf32, #tpu.memory_space<vmem>>, vector<8x128xf32>
    tpu.vector_store %arg8[%c8, %c0_27], %39 {strides = array<i32>} : memref<16x128xf32, #tpu.memory_space<vmem>>, vector<8x128xf32>,
    return
  }
  func.func @transform_0(%arg0: i32) -> (i32, i32) {
    %c0_i32 = arith.constant 0 : i32
    %c0_i32_0 = arith.constant 0 : i32
    return %arg0, %c0_i32 : i32, i32
  }
  func.func @transform_1(%arg0: i32) -> (i32, i32) {
    %c0_i32 = arith.constant 0 : i32
    %c0_i32_0 = arith.constant 0 : i32
    %c0_i32_1 = arith.constant 0 : i32
    return %c0_i32, %c0_i32_0 : i32, i32
  }
  func.func @transform_2(%arg0: i32) -> (i32, i32) {
    %c0_i32 = arith.constant 0 : i32
    %c0_i32_0 = arith.constant 0 : i32
    %c0_i32_1 = arith.constant 0 : i32
    return %c0_i32, %c0_i32_0 : i32, i32
  }
  func.func @transform_3(%arg0: i32) -> (i32, i32) {
    %c0_i32 = arith.constant 0 : i32
    %c0_i32_0 = arith.constant 0 : i32
    %c0_i32_1 = arith.constant 0 : i32
    return %c0_i32, %c0_i32_0 : i32, i32
  }
  func.func @transform_4(%arg0: i32) -> (i32, i32) {
    %c0_i32 = arith.constant 0 : i32
    %c0_i32_0 = arith.constant 0 : i32
    %c0_i32_1 = arith.constant 0 : i32
    return %c0_i32, %c0_i32_0 : i32, i32
  }
  func.func @transform_5(%arg0: i32) -> (i32, i32) {
    %c0_i32 = arith.constant 0 : i32
    %c0_i32_0 = arith.constant 0 : i32
    %c0_i32_1 = arith.constant 0 : i32
    return %c0_i32, %c0_i32_0 : i32, i32
  }
  func.func @transform_6(%arg0: i32) -> (i32, i32) {
    %c0_i32 = arith.constant 0 : i32
    %c0_i32_0 = arith.constant 0 : i32
    %c0_i32_1 = arith.constant 0 : i32
    return %c0_i32, %c0_i32_0 : i32, i32
  }
  func.func @transform_7(%arg0: i32) -> (i32, i32) {
    %c0_i32 = arith.constant 0 : i32
    %c0_i32_0 = arith.constant 0 : i32
    return %c0_i32, %arg0 : i32, i32
  }
}

</mosaic_0001>

<llo_original>
// kernel: actor_forward.1
$region0: #{actor_forward.1}
  #allocation0 [shape = 'u32[]', space=smem, size = 0x4, offset = 0x4, fixed_abs, tag = 'smem constant byte address 0x4 - core index']
  #allocation1 [shape = 'u32[72,128]{1,0:T(1,128)}', space=vmem, size = 0x9000, scoped, tag = 'internal scratch']
  %s0 = inlined_call_operand.vmem [shape: f32[256,32], index: 0, kind: input, shape index: {}]
  %s1 = inlined_call_operand.vmem [shape: bf16[32,128], index: 1, kind: input, shape index: {}]
  %s2 = inlined_call_operand.vmem [shape: f32[1,128], index: 2, kind: input, shape index: {}]
  %s3 = inlined_call_operand.vmem [shape: bf16[128,128], index: 3, kind: input, shape index: {}]
  %s4 = inlined_call_operand.vmem [shape: f32[1,128], index: 4, kind: input, shape index: {}]
  %s5 = inlined_call_operand.vmem [shape: bf16[8,128], index: 5, kind: input, shape index: {}]
  %s6 = inlined_call_operand.vmem [shape: f32[8,1], index: 6, kind: input, shape index: {}]
  %s7 = inlined_call_operand.vmem [shape: f32[16,256], index: 7, kind: output, shape index: {}]
  %s8 = sld [smem:[#allocation0]]
  $region95: #{actor_forward.1} parent=0
    _
  %s10 = ssub.s32 1, %s8
  %s11 = scalar_select 0, %s10, %s8
  $region1: #{actor_forward.1} parent=0
    #allocation2 [shape = 'u8[16384]{0}', space=vmem, size = 0x4000, scoped, tag = 'output window, operand 0']
    loop: start=0, step=1, limit=4
    $region2: #{actor_forward.1} parent=1 // loop_pre_header
      _
    $region3: #{actor_forward.1} parent=1 // loop_header
      %s13 = sphi 0, %s17
      %p14 = scmp.ge.s32.totalorder %s13, 4
      %s23 = sphi 0, %s25
      %s26 = sphi 0, %s23
      %s27 = sphi 0, %s26
      %s43 = sphi 0, %s27
      %s47 = sphi 0, %s47
      %s49 = sphi 0, %s47
      %s50 = sphi 0, %s49
      %s64 = sphi 0, %s50
      %s68 = sphi 0, %s68
      %s70 = sphi 0, %s68
      %s71 = sphi 0, %s70
      %s85 = sphi 0, %s71
      %s89 = sphi 0, %s89
      %s91 = sphi 0, %s89
      %s92 = sphi 0, %s91
      %s106 = sphi 0, %s92
      %s110 = sphi 0, %s110
      %s112 = sphi 0, %s110
      %s113 = sphi 0, %s112
      %s127 = sphi 0, %s113
      %s131 = sphi 0, %s131
      %s133 = sphi 0, %s131
      %s134 = sphi 0, %s133
      %s148 = sphi 0, %s134
      %s152 = sphi 0, %s152
      %s154 = sphi 0, %s152
      %s155 = sphi 0, %s154
      %s169 = sphi 0, %s155
      %s175 = sphi 0, %s177
      %s178 = sphi 0, %s175
      %s179 = sphi 0, %s178
      %s195 = sphi 0, %s179
    $region4: #{actor_forward.1} parent=1 // loop_header_branch
      %16 = sbr.rel (%p14) target = $region8
    $region5: #{actor_forward.1} parent=1 // loop_body
      %s18 = ssub.s32 %s13, 1
      %s19 = ssub.s32 %s13, 2
      %s20 = sadd.s32 %s13, 1
      %s21 = ssub.s32 %s13, %s20
      %p22 = scmp.eq.s32.totalorder %s21, 0
      %s24 = sadd.s32 %s23, 1
      %s25 = scalar_select %p22, %s23, %s24
      %p28 = pneg %p22
      %p29 = scmp.eq.s32.totalorder %s13, 1
      %p30 = por %p28, %p29
      %p31 = scmp.ne.s32.totalorder %s23, %s26
      %p32 = scmp.eq.s32.totalorder %s13, 0
      %p33 = por %p31, %p32
      %p34 = scmp.ne.s32.totalorder %s23, %s26
      %p35 = scmp.eq.s32.totalorder %s18, 1
      %p36 = por %p34, %p35
      %p37 = scmp.ne.s32.totalorder %s26, %s27
      %p38 = scmp.eq.s32.totalorder %s18, 0
      %p39 = por %p37, %p38
      %p40 = scmp.ne.s32.totalorder %s26, %s27
      %p41 = scmp.eq.s32.totalorder %s19, 1
      %p42 = por %p40, %p41
      %p44 = scmp.ne.s32.totalorder %s27, %s43
      %p45 = scmp.eq.s32.totalorder %s19, 0
      %p46 = por %p44, %p45
      %s48 = sadd.s32 %s47, 1
      %p51 = scmp.eq.s32.totalorder %s13, 1
      %p52 = scmp.ne.s32.totalorder %s47, %s49
      %p53 = scmp.eq.s32.totalorder %s13, 0
      %p54 = por %p52, %p53
      %p55 = scmp.ne.s32.totalorder %s47, %s49
      %p56 = scmp.eq.s32.totalorder %s18, 1
      %p57 = por %p55, %p56
      %p58 = scmp.ne.s32.totalorder %s49, %s50
      %p59 = scmp.eq.s32.totalorder %s18, 0
      %p60 = por %p58, %p59
      %p61 = scmp.ne.s32.totalorder %s49, %s50
      %p62 = scmp.eq.s32.totalorder %s19, 1
      %p63 = por %p61, %p62
      %p65 = scmp.ne.s32.totalorder %s50, %s64
      %p66 = scmp.eq.s32.totalorder %s19, 0
      %p67 = por %p65, %p66
      %s69 = sadd.s32 %s68, 1
      %p72 = scmp.eq.s32.totalorder %s13, 1
      %p73 = scmp.ne.s32.totalorder %s68, %s70
      %p74 = scmp.eq.s32.totalorder %s13, 0
      %p75 = por %p73, %p74
      %p76 = scmp.ne.s32.totalorder %s68, %s70
      %p77 = scmp.eq.s32.totalorder %s18, 1
      %p78 = por %p76, %p77
      %p79 = scmp.ne.s32.totalorder %s70, %s71
      %p80 = scmp.eq.s32.totalorder %s18, 0
      %p81 = por %p79, %p80
      %p82 = scmp.ne.s32.totalorder %s70, %s71
      %p83 = scmp.eq.s32.totalorder %s19, 1
      %p84 = por %p82, %p83
      %p86 = scmp.ne.s32.totalorder %s71, %s85
      %p87 = scmp.eq.s32.totalorder %s19, 0
      %p88 = por %p86, %p87
      %s90 = sadd.s32 %s89, 1
      %p93 = scmp.eq.s32.totalorder %s13, 1
      %p94 = scmp.ne.s32.totalorder %s89, %s91
      %p95 = scmp.eq.s32.totalorder %s13, 0
      %p96 = por %p94, %p95
      %p97 = scmp.ne.s32.totalorder %s89, %s91
      %p98 = scmp.eq.s32.totalorder %s18, 1
      %p99 = por %p97, %p98
      %p100 = scmp.ne.s32.totalorder %s91, %s92
      %p101 = scmp.eq.s32.totalorder %s18, 0
      %p102 = por %p100, %p101
      %p103 = scmp.ne.s32.totalorder %s91, %s92
      %p104 = scmp.eq.s32.totalorder %s19, 1
      %p105 = por %p103, %p104
      %p107 = scmp.ne.s32.totalorder %s92, %s106
      %p108 = scmp.eq.s32.totalorder %s19, 0
      %p109 = por %p107, %p108
      %s111 = sadd.s32 %s110, 1
      %p114 = scmp.eq.s32.totalorder %s13, 1
      %p115 = scmp.ne.s32.totalorder %s110, %s112
      %p116 = scmp.eq.s32.totalorder %s13, 0
      %p117 = por %p115, %p116
      %p118 = scmp.ne.s32.totalorder %s110, %s112
      %p119 = scmp.eq.s32.totalorder %s18, 1
      %p120 = por %p118, %p119
      %p121 = scmp.ne.s32.totalorder %s112, %s113
      %p122 = scmp.eq.s32.totalorder %s18, 0
      %p123 = por %p121, %p122
      %p124 = scmp.ne.s32.totalorder %s112, %s113
      %p125 = scmp.eq.s32.totalorder %s19, 1
      %p126 = por %p124, %p125
      %p128 = scmp.ne.s32.totalorder %s113, %s127
      %p129 = scmp.eq.s32.totalorder %s19, 0
      %p130 = por %p128, %p129
      %s132 = sadd.s32 %s131, 1
      %p135 = scmp.eq.s32.totalorder %s13, 1
      %p136 = scmp.ne.s32.totalorder %s131, %s133
      %p137 = scmp.eq.s32.totalorder %s13, 0
      %p138 = por %p136, %p137
      %p139 = scmp.ne.s32.totalorder %s131, %s133
      %p140 = scmp.eq.s32.totalorder %s18, 1
      %p141 = por %p139, %p140
      %p142 = scmp.ne.s32.totalorder %s133, %s134
      %p143 = scmp.eq.s32.totalorder %s18, 0
      %p144 = por %p142, %p143
      %p145 = scmp.ne.s32.totalorder %s133, %s134
      %p146 = scmp.eq.s32.totalorder %s19, 1
      %p147 = por %p145, %p146
      %p149 = scmp.ne.s32.totalorder %s134, %s148
      %p150 = scmp.eq.s32.totalorder %s19, 0
      %p151 = por %p149, %p150
      %s153 = sadd.s32 %s152, 1
      %p156 = scmp.eq.s32.totalorder %s13, 1
      %p157 = scmp.ne.s32.totalorder %s152, %s154
      %p158 = scmp.eq.s32.totalorder %s13, 0
      %p159 = por %p157, %p158
      %p160 = scmp.ne.s32.totalorder %s152, %s154
      %p161 = scmp.eq.s32.totalorder %s18, 1
      %p162 = por %p160, %p161
      %p163 = scmp.ne.s32.totalorder %s154, %s155
      %p164 = scmp.eq.s32.totalorder %s18, 0
      %p165 = por %p163, %p164
      %p166 = scmp.ne.s32.totalorder %s154, %s155
      %p167 = scmp.eq.s32.totalorder %s19, 1
      %p168 = por %p166, %p167
      %p170 = scmp.ne.s32.totalorder %s155, %s169
      %p171 = scmp.eq.s32.totalorder %s19, 0
      %p172 = por %p170, %p171
      %s173 = ssub.s32 %s13, %s20
      %p174 = scmp.eq.s32.totalorder %s173, 0
      %s176 = sadd.s32 %s175, 1
      %s177 = scalar_select %p174, %s175, %s176
      %p180 = pneg %p174
      %p181 = scmp.eq.s32.totalorder %s13, 1
      %p182 = por %p180, %p181
      %p183 = scmp.ne.s32.totalorder %s175, %s178
      %p184 = scmp.eq.s32.totalorder %s13, 0
      %p185 = por %p183, %p184
      %p186 = scmp.ne.s32.totalorder %s175, %s178
      %p187 = scmp.eq.s32.totalorder %s18, 1
      %p188 = por %p186, %p187
      %p189 = scmp.ne.s32.totalorder %s178, %s179
      %p190 = scmp.eq.s32.totalorder %s18, 0
      %p191 = por %p189, %p190
      %p192 = scmp.ne.s32.totalorder %s178, %s179
      %p193 = scmp.eq.s32.totalorder %s19, 1
      %p194 = por %p192, %p193
      %p196 = scmp.ne.s32.totalorder %s179, %s195
      %p197 = scmp.eq.s32.totalorder %s19, 0
      %p198 = por %p196, %p197
      %p199 = scmp.le.s32.totalorder 1, %s13
      %p200 = scmp.lt.s32.totalorder %s13, 3
      %p201 = pnand %p199, %p200
      %p202 = pneg %p201
      // Predicated region
      $region9: #{actor_forward.1} parent=5 // pred_check
        _
      $region10: #{actor_forward.1} parent=5 // pred_check_branch
        %204 = sbr.rel (%p201) target = $region12
      $region11: #{actor_forward.1} parent=5 // pred_region
        %s205 = ssub.s32 %s13, 1
        // Predicated region
        $region13: #{actor_forward.1} parent=11 // pred_check
          %p206 = pneg %p60
        $region14: #{actor_forward.1} parent=11 // pred_check_branch
          %208 = sbr.rel (%p206) target = $region16
        $region15: #{actor_forward.1} parent=11 // pred_region
          _
        $region16: #{actor_forward.1} parent=11 // pred_fallthru
          _
        // Predicated region
        $region17: #{actor_forward.1} parent=11 // pred_check
          %p209 = pneg %p81
        $region18: #{actor_forward.1} parent=11 // pred_check_branch
          %211 = sbr.rel (%p209) target = $region20
        $region19: #{actor_forward.1} parent=11 // pred_region
          _
        $region20: #{actor_forward.1} parent=11 // pred_fallthru
          _
        // Predicated region
        $region21: #{actor_forward.1} parent=11 // pred_check
          %p212 = pneg %p102
        $region22: #{actor_forward.1} parent=11 // pred_check_branch
          %214 = sbr.rel (%p212) target = $region24
        $region23: #{actor_forward.1} parent=11 // pred_region
          _
        $region24: #{actor_forward.1} parent=11 // pred_fallthru
          _
        // Predicated region
        $region25: #{actor_forward.1} parent=11 // pred_check
          %p215 = pneg %p123
        $region26: #{actor_forward.1} parent=11 // pred_check_branch
          %217 = sbr.rel (%p215) target = $region28
        $region27: #{actor_forward.1} parent=11 // pred_region
          _
        $region28: #{actor_forward.1} parent=11 // pred_fallthru
          _
        // Predicated region
        $region29: #{actor_forward.1} parent=11 // pred_check
          %p218 = pneg %p144
        $region30: #{actor_forward.1} parent=11 // pred_check_branch
          %220 = sbr.rel (%p218) target = $region32
        $region31: #{actor_forward.1} parent=11 // pred_region
          _
        $region32: #{actor_forward.1} parent=11 // pred_fallthru
          _
        // Predicated region
        $region33: #{actor_forward.1} parent=11 // pred_check
          %p221 = pneg %p165
        $region34: #{actor_forward.1} parent=11 // pred_check_branch
          %223 = sbr.rel (%p221) target = $region36
        $region35: #{actor_forward.1} parent=11 // pred_region
          _
        $region36: #{actor_forward.1} parent=11 // pred_fallthru
          _
      $region12: #{actor_forward.1} parent=5 // pred_fallthru
        _
      %p224 = scmp.lt.s32.totalorder %s13, 2
      // Predicated region
      $region37: #{actor_forward.1} parent=5 // pred_check
        %p225 = pneg %p224
      $region38: #{actor_forward.1} parent=5 // pred_check_branch
        %227 = sbr.rel (%p225) target = $region40
      $region39: #{actor_forward.1} parent=5 // pred_region
        // Predicated region
        $region41: #{actor_forward.1} parent=39 // pred_check
          %p228 = pneg %p33
        $region42: #{actor_forward.1} parent=39 // pred_check_branch
          %230 = sbr.rel (%p228) target = $region44
        $region43: #{actor_forward.1} parent=39 // pred_region
          %s231 = smul.u32 16, %s13
          %p232 = scmp.lt.s32.totalorder %s231, 31
          %s233 = scalar_select %p232, %s231, 31
          %s234 = smul.addr %s233, 8
          %s235 = scalar_lea.vmem %s0, %s234
          %s236 = smul.u32 16, %s13
        $region44: #{actor_forward.1} parent=39 // pred_fallthru
          _
      $region40: #{actor_forward.1} parent=5 // pred_fallthru
        _
      %p237 = scmp.le.s32.totalorder 1, %s13
      %p238 = scmp.lt.s32.totalorder %s13, 3
      %p239 = pnand %p237, %p238
      %p240 = pneg %p239
      // Predicated region
      $region45: #{actor_forward.1} parent=5 // pred_check
        _
      $region46: #{actor_forward.1} parent=5 // pred_check_branch
        %242 = sbr.rel (%p239) target = $region48
      $region47: #{actor_forward.1} parent=5 // pred_region
        %s243 = ssub.s32 %s13, 1
        %s244 = smul.u32 16, %s18
        %p245 = scmp.lt.s32.totalorder %s244, 31
        %s246 = scalar_select %p245, %s244, 31
        %s247 = smul.addr %s246, 8
        %s248 = scalar_lea.vmem %s0, %s247
        %p249 = pneg %p39
        %p250 = pneg %p36
        %p251 = pneg %p60
        %p252 = pneg %p57
        %p253 = pneg %p81
        %p254 = pneg %p78
        %p255 = pneg %p102
        %p256 = pneg %p99
        %p257 = pneg %p123
        %p258 = pneg %p120
        %p259 = pneg %p144
        %p260 = pneg %p141
        %p261 = pneg %p165
        %p262 = pneg %p162
        %p263 = pneg %p191
        %p264 = pneg %p188
        %s265 = sand.u32 %s178, 1
        %s266 = sand.u32 %s178, 1
        %s267 = smul.addr %s266, 16
        %s268 = scalar_lea.vmem [#allocation2], %s267
        %s269 = smul.u32 16, %s18
        %p270 = scmp.lt.s32.totalorder %s269, 31
        %s271 = scalar_select %p270, %s269, 31
        %s272 = smul.addr %s271, 8
        %s273 = scalar_lea.vmem %s0, %s272
        %s274 = smul.u32 16, %s18
        %v276 = vld [vmem:[%s273] sm:$0xff]
        %v277 = vld [vmem:[%s273 + $0x8] sm:$0xff]
        %v278 = vld [vmem:[%s273 + $0x10] sm:$0xff]
        %v279 = vld [vmem:[%s273 + $0x18] sm:$0xff]
        %v280 = vld [vmem:[%s273 + $0x20] sm:$0xff]
        %v281 = vld [vmem:[%s273 + $0x28] sm:$0xff]
        %v282 = vld [vmem:[%s273 + $0x30] sm:$0xff]
        %v283 = vld [vmem:[%s273 + $0x38] sm:$0xff]
        %v284 = vld [vmem:[%s273 + $0x40] sm:$0xff]
        %v285 = vld [vmem:[%s273 + $0x48] sm:$0xff]
        %v286 = vld [vmem:[%s273 + $0x50] sm:$0xff]
        %v287 = vld [vmem:[%s273 + $0x58] sm:$0xff]
        %v288 = vld [vmem:[%s273 + $0x60] sm:$0xff]
        %v289 = vld [vmem:[%s273 + $0x68] sm:$0xff]
        %v290 = vld [vmem:[%s273 + $0x70] sm:$0xff]
        %v291 = vld [vmem:[%s273 + $0x78] sm:$0xff]
        %v292 = vpack.c.bf16 %v277, %v276
        %v293 = vpack.c.bf16 %v279, %v278
        %v294 = vpack.c.bf16 %v281, %v280
        %v295 = vpack.c.bf16 %v283, %v282
        %v296 = vpack.c.bf16 %v285, %v284
        %v297 = vpack.c.bf16 %v287, %v286
        %v298 = vpack.c.bf16 %v289, %v288
        %v299 = vpack.c.bf16 %v291, %v290
        %v300 = vld [vmem:[%s1] sm:$0xf]
        %v301 = vld [vmem:[%s1 + $0x4] sm:$0xf]
        %v302 = vld [vmem:[%s1 + $0x8] sm:$0xf]
        %v303 = vld [vmem:[%s1 + $0xc] sm:$0xf]
        %v304 = vld [vmem:[%s2] sm:$0x1]
        %v306 = vperm.slane %v304, 0
        %v312 = vunpack.c.l.b16 %v300
        %v313 = vunpack.c.l.b16 %v301
        %v314 = vunpack.c.l.b16 %v302
        %v315 = vunpack.c.l.b16 %v303
        %v316 = vpack.c.b16 %v313, %v312
        %v317 = vpack.c.b16 %v315, %v314
        %vm320 = vcmask 261120
        %v322 = vsel %vm320, %v292, 0
        %v325 = vsel %vm320, %v293, 0
        %v328 = vsel %vm320, %v294, 0
        %v331 = vsel %vm320, %v295, 0
        %v334 = vsel %vm320, %v296, 0
        %v337 = vsel %vm320, %v297, 0
        %v340 = vsel %vm320, %v298, 0
        %v343 = vsel %vm320, %v299, 0
        %345 = vmatpush.bf16.msra.mxu0 0
        %346 = vmatpush.bf16.msra.mxu0 0
        %347 = vmatpush.bf16.msra.mxu0 0
        %348 = vmatpush.bf16.msra.mxu0 0
        %349 = vmatpush.bf16.msra.mxu0 0
        %350 = vmatpush.bf16.msra.mxu0 0
        %351 = vmatpush.bf16.msra.mxu0 %v317
        %352 = vmatpush.bf16.msra.mxu0 %v316
        %353 = vmatmul.bf16.gmra.mxu0 %v322
        %v354 = vpop.f32.mrf.mxu0
        %v355 = vadd.f32 %v306, %v354
        %v356 = vpop.f32.mrf.mxu0
        %v357 = vadd.f32 %v306, %v356
        %358 = vmatmul.bf16.gmra.mxu0 %v325
        %v359 = vpop.f32.mrf.mxu0
        %v360 = vadd.f32 %v306, %v359
        %v361 = vpop.f32.mrf.mxu0
        %v362 = vadd.f32 %v306, %v361
        %363 = vmatmul.bf16.gmra.mxu0 %v328
        %v364 = vpop.f32.mrf.mxu0
        %v365 = vadd.f32 %v306, %v364
        %v366 = vpop.f32.mrf.mxu0
        %v367 = vadd.f32 %v306, %v366
        %368 = vmatmul.bf16.gmra.mxu0 %v331
        %v369 = vpop.f32.mrf.mxu0
        %v370 = vadd.f32 %v306, %v369
        %v371 = vpop.f32.mrf.mxu0
        %v372 = vadd.f32 %v306, %v371
        %373 = vmatmul.bf16.gmra.mxu0 %v334
        %v374 = vpop.f32.mrf.mxu0
        %v375 = vadd.f32 %v306, %v374
        %v376 = vpop.f32.mrf.mxu0
        %v377 = vadd.f32 %v306, %v376
        %378 = vmatmul.bf16.gmra.mxu0 %v337
        %v379 = vpop.f32.mrf.mxu0
        %v380 = vadd.f32 %v306, %v379
        %v381 = vpop.f32.mrf.mxu0
        %v382 = vadd.f32 %v306, %v381
        %383 = vmatmul.bf16.gmra.mxu0 %v340
        %v384 = vpop.f32.mrf.mxu0
        %v385 = vadd.f32 %v306, %v384
        %v386 = vpop.f32.mrf.mxu0
        %v387 = vadd.f32 %v306, %v386
        %388 = vmatmul.bf16.gmra.mxu0 %v343
        %v389 = vpop.f32.mrf.mxu0
        %v390 = vadd.f32 %v306, %v389
        %v391 = vpop.f32.mrf.mxu0
        %v392 = vadd.f32 %v306, %v391
        %393 = vdwg.mxu0
        %v394 = vmax.f32 %v355, 0.0
        %v395 = vmax.f32 %v357, 0.0
        %v396 = vmax.f32 %v360, 0.0
        %v397 = vmax.f32 %v362, 0.0
        %v398 = vmax.f32 %v365, 0.0
        %v399 = vmax.f32 %v367, 0.0
        %v400 = vmax.f32 %v370, 0.0
        %v401 = vmax.f32 %v372, 0.0
        %v402 = vmax.f32 %v375, 0.0
        %v403 = vmax.f32 %v377, 0.0
        %v404 = vmax.f32 %v380, 0.0
        %v405 = vmax.f32 %v382, 0.0
        %v406 = vmax.f32 %v385, 0.0
        %v407 = vmax.f32 %v387, 0.0
        %v408 = vmax.f32 %v390, 0.0
        %v409 = vmax.f32 %v392, 0.0
        %v410 = vpack.c.bf16 %v395, %v394
        %v411 = vpack.c.bf16 %v397, %v396
        %v412 = vpack.c.bf16 %v399, %v398
        %v413 = vpack.c.bf16 %v401, %v400
        %v414 = vpack.c.bf16 %v403, %v402
        %v415 = vpack.c.bf16 %v405, %v404
        %v416 = vpack.c.bf16 %v407, %v406
        %v417 = vpack.c.bf16 %v409, %v408
        %v418 = vld [vmem:[%s3] sm:$0xf]
        %v419 = vld [vmem:[%s3 + $0x4] sm:$0xf]
        %v420 = vld [vmem:[%s3 + $0x8] sm:$0xf]
        %v421 = vld [vmem:[%s3 + $0xc] sm:$0xf]
        %v422 = vld [vmem:[%s3 + $0x10] sm:$0xf]
        %v423 = vld [vmem:[%s3 + $0x14] sm:$0xf]
        %v424 = vld [vmem:[%s3 + $0x18] sm:$0xf]
        %v425 = vld [vmem:[%s3 + $0x1c] sm:$0xf]
        %v426 = vld [vmem:[%s3 + $0x20] sm:$0xf]
        %v427 = vld [vmem:[%s3 + $0x24] sm:$0xf]
        %v428 = vld [vmem:[%s3 + $0x28] sm:$0xf]
        %v429 = vld [vmem:[%s3 + $0x2c] sm:$0xf]
        %v430 = vld [vmem:[%s3 + $0x30] sm:$0xf]
        %v431 = vld [vmem:[%s3 + $0x34] sm:$0xf]
        %v432 = vld [vmem:[%s3 + $0x38] sm:$0xf]
        %v433 = vld [vmem:[%s3 + $0x3c] sm:$0xf]
        %v434 = vld [vmem:[%s4] sm:$0x1]
        %v436 = vperm.slane %v434, 0
        %v454 = vunpack.c.l.b16 %v418
        %v455 = vunpack.c.l.b16 %v419
        %v456 = vunpack.c.l.b16 %v420
        %v457 = vunpack.c.l.b16 %v421
        %v458 = vunpack.c.l.b16 %v422
        %v459 = vunpack.c.l.b16 %v423
        %v460 = vunpack.c.l.b16 %v424
        %v461 = vunpack.c.l.b16 %v425
        %v462 = vunpack.c.l.b16 %v426
        %v463 = vunpack.c.l.b16 %v427
        %v464 = vunpack.c.l.b16 %v428
        %v465 = vunpack.c.l.b16 %v429
        %v466 = vunpack.c.l.b16 %v430
        %v467 = vunpack.c.l.b16 %v431
        %v468 = vunpack.c.l.b16 %v432
        %v469 = vunpack.c.l.b16 %v433
        %v470 = vpack.c.b16 %v455, %v454
        %v471 = vpack.c.b16 %v457, %v456
        %v472 = vpack.c.b16 %v459, %v458
        %v473 = vpack.c.b16 %v461, %v460
        %v474 = vpack.c.b16 %v463, %v462
        %v475 = vpack.c.b16 %v465, %v464
        %v476 = vpack.c.b16 %v467, %v466
        %v477 = vpack.c.b16 %v469, %v468
        %486 = vmatpush.bf16.msra.mxu0 %v477
        %487 = vmatpush.bf16.msra.mxu0 %v476
        %488 = vmatpush.bf16.msra.mxu0 %v475
        %489 = vmatpush.bf16.msra.mxu0 %v474
        %490 = vmatpush.bf16.msra.mxu0 %v473
        %491 = vmatpush.bf16.msra.mxu0 %v472
        %492 = vmatpush.bf16.msra.mxu0 %v471
        %493 = vmatpush.bf16.msra.mxu0 %v470
        %494 = vmatmul.bf16.gmra.mxu0 %v410
        %v495 = vpop.f32.mrf.mxu0
        %v496 = vadd.f32 %v436, %v495
        %v497 = vpop.f32.mrf.mxu0
        %v498 = vadd.f32 %v436, %v497
        %499 = vmatmul.bf16.gmra.mxu0 %v411
        %v500 = vpop.f32.mrf.mxu0
        %v501 = vadd.f32 %v436, %v500
        %v502 = vpop.f32.mrf.mxu0
        %v503 = vadd.f32 %v436, %v502
        %504 = vmatmul.bf16.gmra.mxu0 %v412
        %v505 = vpop.f32.mrf.mxu0
        %v506 = vadd.f32 %v436, %v505
        %v507 = vpop.f32.mrf.mxu0
        %v508 = vadd.f32 %v436, %v507
        %509 = vmatmul.bf16.gmra.mxu0 %v413
        %v510 = vpop.f32.mrf.mxu0
        %v511 = vadd.f32 %v436, %v510
        %v512 = vpop.f32.mrf.mxu0
        %v513 = vadd.f32 %v436, %v512
        %514 = vmatmul.bf16.gmra.mxu0 %v414
        %v515 = vpop.f32.mrf.mxu0
        %v516 = vadd.f32 %v436, %v515
        %v517 = vpop.f32.mrf.mxu0
        %v518 = vadd.f32 %v436, %v517
        %519 = vmatmul.bf16.gmra.mxu0 %v415
        %v520 = vpop.f32.mrf.mxu0
        %v521 = vadd.f32 %v436, %v520
        %v522 = vpop.f32.mrf.mxu0
        %v523 = vadd.f32 %v436, %v522
        %524 = vmatmul.bf16.gmra.mxu0 %v416
        %v525 = vpop.f32.mrf.mxu0
        %v526 = vadd.f32 %v436, %v525
        %v527 = vpop.f32.mrf.mxu0
        %v528 = vadd.f32 %v436, %v527
        %529 = vmatmul.bf16.gmra.mxu0 %v417
        %v530 = vpop.f32.mrf.mxu0
        %v531 = vadd.f32 %v436, %v530
        %v532 = vpop.f32.mrf.mxu0
        %v533 = vadd.f32 %v436, %v532
        %534 = vdwg.mxu0
        %v535 = vmax.f32 %v496, 0.0
        %v536 = vmax.f32 %v498, 0.0
        %v537 = vmax.f32 %v501, 0.0
        %v538 = vmax.f32 %v503, 0.0
        %v539 = vmax.f32 %v506, 0.0
        %v540 = vmax.f32 %v508, 0.0
        %v541 = vmax.f32 %v511, 0.0
        %v542 = vmax.f32 %v513, 0.0
        %v543 = vmax.f32 %v516, 0.0
        %v544 = vmax.f32 %v518, 0.0
        %v545 = vmax.f32 %v521, 0.0
        %v546 = vmax.f32 %v523, 0.0
        %v547 = vmax.f32 %v526, 0.0
        %v548 = vmax.f32 %v528, 0.0
        %v549 = vmax.f32 %v531, 0.0
        %v550 = vmax.f32 %v533, 0.0
        %v551 = vpack.c.bf16 %v536, %v535
        %v552 = vpack.c.bf16 %v538, %v537
        %v553 = vpack.c.bf16 %v540, %v539
        %v554 = vpack.c.bf16 %v542, %v541
        %v555 = vpack.c.bf16 %v544, %v543
        %v556 = vpack.c.bf16 %v546, %v545
        %v557 = vpack.c.bf16 %v548, %v547
        %v558 = vpack.c.bf16 %v550, %v549
        %559 = vmatpush.bf16.msra.mxu0 %v477
        %560 = vmatpush.bf16.msra.mxu0 %v476
        %561 = vmatpush.bf16.msra.mxu0 %v475
        %562 = vmatpush.bf16.msra.mxu0 %v474
        %563 = vmatpush.bf16.msra.mxu0 %v473
        %564 = vmatpush.bf16.msra.mxu0 %v472
        %565 = vmatpush.bf16.msra.mxu0 %v471
        %566 = vmatpush.bf16.msra.mxu0 %v470
        %567 = vmatmul.bf16.gmra.mxu0 %v551
        %v568 = vpop.f32.mrf.mxu0
        %v569 = vadd.f32 %v436, %v568
        %v570 = vpop.f32.mrf.mxu0
        %v571 = vadd.f32 %v436, %v570
        %572 = vmatmul.bf16.gmra.mxu0 %v552
        %v573 = vpop.f32.mrf.mxu0
        %v574 = vadd.f32 %v436, %v573
        %v575 = vpop.f32.mrf.mxu0
        %v576 = vadd.f32 %v436, %v575
        %577 = vmatmul.bf16.gmra.mxu0 %v553
        %v578 = vpop.f32.mrf.mxu0
        %v579 = vadd.f32 %v436, %v578
        %v580 = vpop.f32.mrf.mxu0
        %v581 = vadd.f32 %v436, %v580
        %582 = vmatmul.bf16.gmra.mxu0 %v554
        %v583 = vpop.f32.mrf.mxu0
        %v584 = vadd.f32 %v436, %v583
        %v585 = vpop.f32.mrf.mxu0
        %v586 = vadd.f32 %v436, %v585
        %587 = vmatmul.bf16.gmra.mxu0 %v555
        %v588 = vpop.f32.mrf.mxu0
        %v589 = vadd.f32 %v436, %v588
        %v590 = vpop.f32.mrf.mxu0
        %v591 = vadd.f32 %v436, %v590
        %592 = vmatmul.bf16.gmra.mxu0 %v556
        %v593 = vpop.f32.mrf.mxu0
        %v594 = vadd.f32 %v436, %v593
        %v595 = vpop.f32.mrf.mxu0
        %v596 = vadd.f32 %v436, %v595
        %597 = vmatmul.bf16.gmra.mxu0 %v557
        %v598 = vpop.f32.mrf.mxu0
        %v599 = vadd.f32 %v436, %v598
        %v600 = vpop.f32.mrf.mxu0
        %v601 = vadd.f32 %v436, %v600
        %602 = vmatmul.bf16.gmra.mxu0 %v558
        %v603 = vpop.f32.mrf.mxu0
        %v604 = vadd.f32 %v436, %v603
        %v605 = vpop.f32.mrf.mxu0
        %v606 = vadd.f32 %v436, %v605
        %607 = vdwg.mxu0
        %v608 = vmax.f32 %v569, 0.0
        %v609 = vmax.f32 %v571, 0.0
        %v610 = vmax.f32 %v574, 0.0
        %v611 = vmax.f32 %v576, 0.0
        %v612 = vmax.f32 %v579, 0.0
        %v613 = vmax.f32 %v581, 0.0
        %v614 = vmax.f32 %v584, 0.0
        %v615 = vmax.f32 %v586, 0.0
        %v616 = vmax.f32 %v589, 0.0
        %v617 = vmax.f32 %v591, 0.0
        %v618 = vmax.f32 %v594, 0.0
        %v619 = vmax.f32 %v596, 0.0
        %v620 = vmax.f32 %v599, 0.0
        %v621 = vmax.f32 %v601, 0.0
        %v622 = vmax.f32 %v604, 0.0
        %v623 = vmax.f32 %v606, 0.0
        %v624 = vpack.c.bf16 %v609, %v608
        %v625 = vpack.c.bf16 %v611, %v610
        %v626 = vpack.c.bf16 %v613, %v612
        %v627 = vpack.c.bf16 %v615, %v614
        %v628 = vpack.c.bf16 %v617, %v616
        %v629 = vpack.c.bf16 %v619, %v618
        %v630 = vpack.c.bf16 %v621, %v620
        %v631 = vpack.c.bf16 %v623, %v622
        %v632 = vld [vmem:[%s5] sm:$0xf]
        %v633 = vld [vmem:[%s6] sm:$0xff]
        %635 = vset.pattern.permute.xlu0 0
        %636 = vperm.xlu0 %635, %v633
        %v637 = vpop.permute.xlu0 %636
        %639 = vmatpush.bf16.xpose.msra.mxu0 %v631
        %640 = vmatpush.bf16.xpose.msra.mxu0 %v630
        %641 = vmatpush.bf16.xpose.msra.mxu0 %v629
        %642 = vmatpush.bf16.xpose.msra.mxu0 %v628
        %643 = vmatpush.bf16.xpose.msra.mxu0 %v627
        %644 = vmatpush.bf16.xpose.msra.mxu0 %v626
        %645 = vmatpush.bf16.xpose.msra.mxu0 %v625
        %646 = vmatpush.bf16.xpose.msra.mxu0 %v624
        %647 = vmatmul.bf16.gmra.mxu0 %v632
        %v648 = vpop.f32.mrf.mxu0
        %v649 = vadd.f32 %v637, %v648
        %v650 = vpop.f32.mrf.mxu0
        %651 = vdwg.mxu0
        %v652 = vrot.slane %v649, 4
        %v653 = vmax.f32 %v649, %v652
        %v654 = vrot.slane %v653, 2
        %v655 = vmax.f32 %v653, %v654
        %v656 = vrot.slane %v655, 1
        %v657 = vmax.f32 %v655, %v656
        %v658 = vsub.f32 %v649, %v657
        %v659 = vmul.f32 %v658, 1.442695
        %v660 = vpow.pop %v659
        %v661 = vrot.slane %v660, 4
        %v662 = vadd.f32 %v660, %v661
        %v663 = vrot.slane %v662, 2
        %v664 = vadd.f32 %v662, %v663
        %v665 = vrot.slane %v664, 1
        %v666 = vadd.f32 %v664, %v665
        %v667 = vrcp.pop %v666
        %v668 = vmul.f32 %v666, %v667
        %v669 = vsub.f32 1.0, %v668
        %v670 = vmul.f32 %v667, %v669
        %v671 = vadd.f32 %v667, %v670
        %vm672 = vweird.f32 %v666
        %vm673 = vweird.f32 %v667
        %vm674 = vmor %vm672, %vm673
        %v675 = vsel %vm674, %v667, %v671
        %v676 = vand.u32 2147483647, %v666
        %vm677 = vcmp.eq.f32.partialorder %v676, 8.507059e+37
        %v678 = vand.u32 %v666, 2147483648
        %v679 = vor.u32 1.1754944e-38, %v678
        %v680 = vsel %vm677, %v679, %v675
        %v681 = vmul.f32 %v660, %v680
        %682 = vst [vmem:[%s268] sm:$0xff] %v649
        %683 = vst [vmem:[%s268 + $0x8] sm:$0xff] %v681
        %s684 = sand.u32 %s178, 1
        %s685 = sand.u32 %s178, 1
        %s686 = smul.addr %s685, 16
        %s687 = scalar_lea.vmem [#allocation2], %s686
        // Predicated region
        $region49: #{actor_forward.1} parent=47 // pred_check
          %p688 = pneg %p188
        $region50: #{actor_forward.1} parent=47 // pred_check_branch
          %690 = sbr.rel (%p688) target = $region52
        $region51: #{actor_forward.1} parent=47 // pred_region
          %s691 = smul.addr %s18, 8
          %s692 = scalar_lea.vmem %s7, %s691
          // Predicated region
          $region53: #{actor_forward.1} parent=51 // pred_check
            _
          $region54: #{actor_forward.1} parent=51 // pred_check_branch
            %694 = sbr.rel (0) target = $region56
          $region55: #{actor_forward.1} parent=51 // pred_region
            // Predicated region
            $region57: #{actor_forward.1} parent=55 // pred_check
              _
            $region58: #{actor_forward.1} parent=55 // pred_check_branch
              %696 = sbr.rel (0) target = $region60
            $region59: #{actor_forward.1} parent=55 // pred_region
              // Predicated region
              $region72: #{actor_forward.1} parent=59 // pred_check
                _
              $region73: #{actor_forward.1} parent=59 // pred_check_branch
                %714 = sbr.rel (0) target = $region75
              $region74: #{actor_forward.1} parent=59 // pred_region
                loop: start=0, step=1, limit=1
                $region76: #{actor_forward.1} parent=74 // loop_pre_header
                  _
                $region77: #{actor_forward.1} parent=74 // loop_header
                  %s716 = sphi 0, %s720
                  %p717 = scmp.ge.s32.totalorder %s716, 1
                  %s721 = sphi %s687, %s687
                  %s722 = sphi %s692, %s692
                $region78: #{actor_forward.1} parent=74 // loop_header_branch
                  %719 = sbr.rel (%p717) target = $region82
                $region79: #{actor_forward.1} parent=74 // loop_body
                  %v723 = vld [vmem:[%s721] sm:$0xff]
                  %724 = vst [vmem:[%s722] sm:$0xff] %v723
                  %v725 = vld [vmem:[%s721 + $0x8] sm:$0xff]
                  %726 = vst [vmem:[%s722 + $0x10] sm:$0xff] %v725
                $region80: #{actor_forward.1} parent=74 // loop_footer
                  %s720 = sadd.s32 1, %s716
                $region81: #{actor_forward.1} parent=74 // loop_footer_branch
                  %715 = sbr.rel target = $region77
                $region82: #{actor_forward.1} parent=74 // loop_exit
                  _
              $region75: #{actor_forward.1} parent=59 // pred_fallthru
                _
              // Predicated region
              $region83: #{actor_forward.1} parent=59 // pred_check
                _
              $region84: #{actor_forward.1} parent=59 // pred_check_branch
                %728 = sbr.rel target = $region86
              $region85: #{actor_forward.1} parent=59 // pred_region
                _
              $region86: #{actor_forward.1} parent=59 // pred_fallthru
                _
            $region60: #{actor_forward.1} parent=55 // pred_fallthru
              _
            // Predicated region
            $region61: #{actor_forward.1} parent=55 // pred_check
              _
            $region62: #{actor_forward.1} parent=55 // pred_check_branch
              %698 = sbr.rel target = $region64
            $region63: #{actor_forward.1} parent=55 // pred_region
              %s700 = ssub.s32 256, 1
              loop: start=0, step=1, limit=1
              $region65: #{actor_forward.1} parent=63 // loop_pre_header
                _
              $region66: #{actor_forward.1} parent=63 // loop_header
                %s702 = sphi 0, %s706
                %p703 = scmp.ge.s32.totalorder %s702, 1
                %s707 = sphi %s687, %s687
                %s708 = sphi %s692, %s692
              $region67: #{actor_forward.1} parent=63 // loop_header_branch
                %705 = sbr.rel (%p703) target = $region71
              $region68: #{actor_forward.1} parent=63 // loop_body
                %v709 = vld [vmem:[%s707] sm:%s700]
                %710 = vst [vmem:[%s708] sm:%s700] %v709
                %v711 = vld [vmem:[%s707 + $0x8] sm:%s700]
                %712 = vst [vmem:[%s708 + $0x10] sm:%s700] %v711
              $region69: #{actor_forward.1} parent=63 // loop_footer
                %s706 = sadd.s32 1, %s702
              $region70: #{actor_forward.1} parent=63 // loop_footer_branch
                %701 = sbr.rel target = $region66
              $region71: #{actor_forward.1} parent=63 // loop_exit
                _
            $region64: #{actor_forward.1} parent=55 // pred_fallthru
              _
          $region56: #{actor_forward.1} parent=51 // pred_fallthru
            _
          %729 = vnop
        $region52: #{actor_forward.1} parent=47 // pred_fallthru
          _
      $region48: #{actor_forward.1} parent=5 // pred_fallthru
        _
      %p730 = scmp.le.s32.totalorder 2, %s13
      // Predicated region
      $region87: #{actor_forward.1} parent=5 // pred_check
        %p731 = pneg %p730
      $region88: #{actor_forward.1} parent=5 // pred_check_branch
        %733 = sbr.rel (%p731) target = $region90
      $region89: #{actor_forward.1} parent=5 // pred_region
        %s734 = ssub.s32 %s13, 2
        // Predicated region
        $region91: #{actor_forward.1} parent=89 // pred_check
          %p735 = pneg %p194
        $region92: #{actor_forward.1} parent=89 // pred_check_branch
          %737 = sbr.rel (%p735) target = $region94
        $region93: #{actor_forward.1} parent=89 // pred_region
          %s738 = sand.u32 %s179, 1
          %s739 = sand.u32 %s179, 1
          %s740 = smul.addr %s739, 16
          %s741 = scalar_lea.vmem [#allocation2], %s740
        $region94: #{actor_forward.1} parent=89 // pred_fallthru
          _
      $region90: #{actor_forward.1} parent=5 // pred_fallthru
        _
    $region6: #{actor_forward.1} parent=1 // loop_footer
      %s17 = sadd.s32 1, %s13
    $region7: #{actor_forward.1} parent=1 // loop_footer_branch
      %12 = sbr.rel target = $region3
    $region8: #{actor_forward.1} parent=1 // loop_exit
      _

</llo_original>
